<compile_context>
chip_gen: v7x
topology: tpu7x:2x2x1
jax: 0.10.0
libtpu: 0.0.40
codegen_flags: <defaults>
</compile_context>

<pallas_src>
import math

import jax
import jax.numpy as jnp
from jax.experimental import pallas as pl
from jax.experimental.pallas import tpu as pltpu


# --------------------------------------------------------------------------- helpers

def _vmem_budget_bytes():
    """~75% of this generation's physical VMEM (v5e/v6e 128 MiB, v7x 64 MiB)."""
    cap = 64 * 2**20                                   # conservative default = v7x
    try:
        info = pltpu.get_tpu_info()
        cap = int(getattr(info, "vmem_capacity_bytes", cap))
    except Exception:
        pass
    return (cap * 3) // 4


def _padded_block_bytes(sublanes, lanes, itemsize):
    """VMEM footprint of one block after (8,128) tile padding."""
    return (-(-sublanes // 8) * 8) * (-(-lanes // 128) * 128) * itemsize


def _pick_chunk(hw_eff, c_eff, itemsize, budget):
    """Largest lane chunk that divides hw_eff, is a multiple of 128, keeps
    2 in + 2 out double-buffered chunk blocks inside the VMEM budget, and still
    leaves several pipeline steps per image."""
    if hw_eff % 128 != 0:
        # TODO(synk): pad H*W to a multiple of 128 for huge unaligned images; here we
        # fall back to one full-width chunk per batch element.
        return hw_eff
    c_pad = -(-c_eff // 8) * 8
    per_lane = 4 * c_pad * max(itemsize, 4)            # 2 in + 2 out buffers, fp32 worst case
    max_lanes = max(128, (budget // max(per_lane, 1)) // 128 * 128)
    steps_target = max(128, (hw_eff // 8) // 128 * 128)  # aim for >= ~8 steps per image
    target = max(128, min(max_lanes, steps_target))
    m = hw_eff // 128
    best = 1
    q = 1
    while q * q <= m:
        if m % q == 0:
            for cand in (q, m // q):
                if 128 * cand <= target and cand > best:
                    best = cand
        q += 1
    return 128 * best


def _erf_approx(x):
    """Abramowitz & Stegun 7.1.26 (|err| < 1.5e-7): exp + polynomial only, so it
    lowers on Mosaic without needing an erf primitive."""
    ax = jnp.abs(x)
    t = 1.0 / (1.0 + 0.3275911 * ax)
    poly = t * (0.254829592 + t * (-0.284496736 + t * (1.421413741
               + t * (-1.453152027 + t * 1.061405429))))
    y = 1.0 - poly * jnp.exp(-ax * ax)
    return jnp.where(x < 0.0, -y, y)


def _gelu_exact_kernel(x):
    # PyTorch nn.GELU() default (approximate='none'): 0.5*x*(1+erf(x/sqrt(2)))
    return 0.5 * x * (1.0 + _erf_approx(x * 0.7071067811865476))


# --------------------------------------------------------------------------- kernels

def _fused_kernel(x_ref, w1t_ref, b1_ref, w2_ref, b2_ref, o_ref):
    # x_ref block: (1, C, HW); everything accumulates/gates in fp32.
    xf = x_ref[0].astype(jnp.float32)                                  # (C, HW)
    inv_hw = 1.0 / xf.shape[1]
    pooled = jnp.sum(xf, axis=1, keepdims=True) * inv_hw               # (C, 1)  XLU lane-reduce

    # squeeze (dim -> hid): VPU broadcast-MAC + sublane reduce (tiny; no MXU push/drain)
    s = jnp.sum(w1t_ref[...] * pooled, axis=0, keepdims=True) + b1_ref[...]   # (1, hid)
    s = _gelu_exact_kernel(s)
    # excite (hid -> dim): VPU broadcast-MAC + lane reduce
    g = jnp.sum(w2_ref[...] * s, axis=1, keepdims=True) + b2_ref[...]          # (C, 1)
    g = jax.nn.sigmoid(g)

    # Fresh read for the scale step (don't hold the whole block live across the gate).
    o_ref[0] = (x_ref[0].astype(jnp.float32) * g).astype(o_ref.dtype)


def _pool_kernel(x_ref, sum_ref):
    # grid = (B, n_chunks); chunk axis is a reduction -> sum_ref is a resident accumulator.
    @pl.when(pl.program_id(1) == 0)
    def _():
        sum_ref[...] = jnp.zeros_like(sum_ref)
    sum_ref[0] += jnp.sum(x_ref[0].astype(jnp.float32), axis=1, keepdims=True)  # (C_eff, 1)


def _apply_kernel(x_ref, g_ref, o_ref):
    # grid = (B, n_chunks), both axes parallel; lane-dense read-multiply-store.
    o_ref[0] = (x_ref[0].astype(jnp.float32) * g_ref[0]).astype(o_ref.dtype)


# --------------------------------------------------------------------------- wrappers

def _se_fused(x, params_f32, budget, donate_x):
    w1, b1, w2, b2 = params_f32
    B, C, HW = x.shape
    w1t = jnp.transpose(w1, (1, 0))          # (C, hid)
    b1r = b1.reshape(1, -1)                  # (1, hid)
    b2r = b2.reshape(-1, 1)                  # (C, 1)

    def full(a):
        return pl.BlockSpec(a.shape, lambda b: (0,) * a.ndim)

    return pl.pallas_call(
        _fused_kernel,
        out_shape=jax.ShapeDtypeStruct((B, C, HW), x.dtype),
        grid=(B,),
        in_specs=[pl.BlockSpec((1, C, HW), lambda b: (b, 0, 0)),
                  full(w1t), full(b1r), full(w2), full(b2r)],
        out_specs=pl.BlockSpec((1, C, HW), lambda b: (b, 0, 0)),
        input_output_aliases=({0: 0} if donate_x else {}),
        compiler_params=pltpu.CompilerParams(
            dimension_semantics=("parallel",),
            vmem_limit_bytes=int(budget)),
    )(x, w1t, b1r, w2, b2r)


def _se_two_pass(x, params_f32, budget, donate_x):
    w1, b1, w2, b2 = params_f32
    B, C, HW = x.shape
    dtype = x.dtype
    itemsize = jnp.dtype(dtype).itemsize

    # Sublane re-pack: view (C, HW) as (C*k, HW/k) so sublanes fill (8,*) tiles.
    k = 8 // math.gcd(C, 8)
    if k > 1 and HW % k == 0:
        c_eff, hw_eff = C * k, HW // k
    else:
        k, c_eff, hw_eff = 1, C, HW
    xe = x.reshape(B, c_eff, hw_eff)

    chunk = _pick_chunk(hw_eff, c_eff, itemsize, budget)
    n_chunks = hw_eff // chunk

    # ---- pass 1: per-row (channel-slice) sums, fp32 accumulation -------------------
    sums = pl.pallas_call(
        _pool_kernel,
        out_shape=jax.ShapeDtypeStruct((B, c_eff, 1), jnp.float32),
        grid=(B, n_chunks),
        in_specs=[pl.BlockSpec((1, c_eff, chunk), lambda b, j: (b, 0, j))],
        out_specs=pl.BlockSpec((1, c_eff, 1), lambda b, j: (b, 0, 0)),
        compiler_params=pltpu.CompilerParams(
            dimension_semantics=("parallel", "arbitrary"),
            vmem_limit_bytes=int(budget)),
    )(xe)

    # ---- tiny (B, C) gate MLP in fp32 (negligible work; plain JAX) ------------------
    pooled = sums.reshape(B, C, k).sum(axis=2) * (1.0 / HW)            # (B, C)
    s = pooled @ w1.T + b1
    s = jax.nn.gelu(s, approximate=False)
    g = jax.nn.sigmoid(s @ w2.T + b2)                                  # (B, C)
    g_eff = jnp.repeat(g, k, axis=1).reshape(B, c_eff, 1).astype(jnp.float32)

    # ---- pass 2: re-stream chunks and apply the gate (fully parallel grid) ----------
    out = pl.pallas_call(
        _apply_kernel,
        out_shape=jax.ShapeDtypeStruct((B, c_eff, hw_eff), dtype),
        grid=(B, n_chunks),
        in_specs=[pl.BlockSpec((1, c_eff, chunk), lambda b, j: (b, 0, j)),
                  pl.BlockSpec((1, c_eff, 1), lambda b, j: (b, 0, 0))],
        out_specs=pl.BlockSpec((1, c_eff, chunk), lambda b, j: (b, 0, j)),
        input_output_aliases=({0: 0} if donate_x else {}),
        compiler_params=pltpu.CompilerParams(
            dimension_semantics=("parallel", "parallel"),
            vmem_limit_bytes=int(budget)),
    )(xe, g_eff)

    return out.reshape(B, C, HW)


def squeeze_excitation_forward(x_nchw, params, donate_x=False):
    """x_nchw: (B, C, H, W) float32 or bfloat16. Returns x * gate(x), same dtype."""
    w1, b1, w2, b2 = (p.astype(jnp.float32) for p in params)
    B, C, H, W = x_nchw.shape
    HW = H * W
    itemsize = jnp.dtype(x_nchw.dtype).itemsize
    budget = _vmem_budget_bytes()

    x = x_nchw.reshape(B, C, HW)             # NCHW -> channel-major, free reshape

    # Fused single-pass path: needs enough grid steps for pipeline steady state,
    # unmasked sublanes, and 2-in + 2-out full-image blocks (+ fp32 temp) within budget.
    full_blk = _padded_block_bytes(C, HW, itemsize)
    fused_need = 4 * full_blk + _padded_block_bytes(C, HW, 4) + (1 << 20)
    if B >= 4 and C % 8 == 0 and fused_need <= budget:
        out = _se_fused(x, (w1, b1, w2, b2), budget, donate_x)
    else:
        out = _se_two_pass(x, (w1, b1, w2, b2), budget, donate_x)

    return out.reshape(B, C, H, W)


# --------------------------------------------------------------------------- reference

def init_params(key, dim, shrinkage_rate=0.25, dtype=jnp.float32):
    hid = int(dim * shrinkage_rate)          # matches PyTorch: int(dim * shrinkage_rate)
    ks = jax.random.split(key, 4)

    def w(k, shape, fan_in):
        return (jax.random.normal(k, shape, jnp.float32) / jnp.sqrt(float(fan_in))).astype(dtype)

    w1 = w(ks[0], (hid, dim), dim)           # Conv2d(dim, hid, 1) weight (OIHW squeezed)
    b1 = w(ks[1], (hid,), dim)
    w2 = w(ks[2], (dim, hid), hid)           # Conv2d(hid, dim, 1) weight
    b2 = w(ks[3], (dim,), hid)
    return (w1, b1, w2, b2)


def se_reference(x_nchw, params):
    """Pure-JAX fp32 reference matching the PyTorch SqueezeExcitation module."""
    w1, b1, w2, b2 = (p.astype(jnp.float32) for p in params)
    xf = x_nchw.astype(jnp.float32)
    pooled = jnp.mean(xf, axis=(2, 3), keepdims=True)                        # (B, C, 1, 1)
    s = jnp.einsum('bchw,oc->bohw', pooled, w1) + b1.reshape(1, -1, 1, 1)
    s = jax.nn.gelu(s, approximate=False)
    g = jax.nn.sigmoid(jnp.einsum('bchw,oc->bohw', s, w2) + b2.reshape(1, -1, 1, 1))
    return xf * g


# --------------------------------------------------------------------------- demo

if __name__ == "__main__":
    key = jax.random.PRNGKey(0)
    k1, k2, k3, k4, kp4, kp8 = jax.random.split(key, 6)

    params4 = init_params(kp4, 4)            # hid = 1
    params8 = init_params(kp8, 8)            # hid = 2

    # 1) primary shape: fp32, two-pass path (B < 4), sublane re-pack C=4 -> (8, HW/2)
    x1 = jax.random.normal(k1, (2, 4, 16, 16), jnp.float32)
    y1 = jax.block_until_ready(squeeze_excitation_forward(x1, params4))
    r1 = se_reference(x1, params4)
    assert y1.shape == x1.shape and y1.dtype == x1.dtype
    assert jnp.allclose(y1, r1, atol=2e-5, rtol=1e-5), float(jnp.max(jnp.abs(y1 - r1)))

    # 2) fused single-pass path (B >= 4, C % 8 == 0, fits VMEM)
    x2 = jax.random.normal(k2, (4, 8, 16, 16), jnp.float32)
    y2 = jax.block_until_ready(squeeze_excitation_forward(x2, params8))
    r2 = se_reference(x2, params8)
    assert jnp.allclose(y2, r2, atol=2e-5, rtol=1e-5), float(jnp.max(jnp.abs(y2 - r2)))

    # 3) two-pass path with several lane chunks (exercises the accumulate/apply pipeline)
    x3 = jax.random.normal(k3, (2, 4, 32, 32), jnp.float32)
    y3 = jax.block_until_ready(squeeze_excitation_forward(x3, params4))
    r3 = se_reference(x3, params4)
    assert jnp.allclose(y3, r3, atol=2e-5, rtol=1e-5), float(jnp.max(jnp.abs(y3 - r3)))

    # 4) bf16 activations: bf16 I/O, fp32 pooled accumulation + gate math
    x4 = jax.random.normal(k4, (2, 4, 16, 16), jnp.float32).astype(jnp.bfloat16)
    y4 = jax.block_until_ready(squeeze_excitation_forward(x4, params4))
    r4 = se_reference(x4, params4)
    assert y4.dtype == jnp.bfloat16
    assert jnp.allclose(y4.astype(jnp.float32), r4, atol=5e-2, rtol=5e-2), \
        float(jnp.max(jnp.abs(y4.astype(jnp.float32) - r4)))

    print("KERNEL_OK")
</pallas_src>

<mosaic_0001>
module attributes {stable_mosaic.version = 11 : i64} {
  func.func @_pool_kernel(%arg0: i32, %arg1: i32, %arg2: memref<1x8x128xf32, #tpu.memory_space<vmem>>, %arg3: memref<1x8x1xf32, #tpu.memory_space<vmem>>) attributes {dimension_semantics = [#tpu.dimension_semantics<parallel>, #tpu.dimension_semantics<arbitrary>], iteration_bounds = array<i64: 2, 1>, scalar_prefetch = 0 : i64, scratch_operands = 0 : i64, tpu.core_type = #tpu.core_type<tc>, window_params = [{transform_indices = @transform_0, window_bounds = array<i64: 1, 8, 128>}, {transform_indices = @transform_1, window_bounds = array<i64: 1, 8, 1>}]} {
    %c0_i32 = arith.constant 0 : i32
    %0 = arith.cmpi eq, %arg1, %c0_i32 : i32
    %1 = arith.extui %0 : i1 to i32
    %c0_i32_0 = arith.constant 0 : i32
    %2 = arith.cmpi ne, %1, %c0_i32_0 : i32
    scf.if %2 {
      %cst_9 = arith.constant 0.000000e+00 : f32
      %13 = vector.broadcast %cst_9 : f32 to vector<1x8x1xf32>
      %c0_10 = arith.constant 0 : index
      %c0_11 = arith.constant 0 : index
      %c0_12 = arith.constant 0 : index
      %14 = vector.load %arg3[%c0_10, %c0_11, %c0_12] : memref<1x8x1xf32, #tpu.memory_space<vmem>>, vector<1x8x1xf32>
      tpu.vector_store %arg3[%c0_10, %c0_11, %c0_12], %13 {strides = array<i32>} : memref<1x8x1xf32, #tpu.memory_space<vmem>>, vector<1x8x1xf32>,
    } else {
    }
    %c0 = arith.constant 0 : index
    %c0_1 = arith.constant 0 : index
    %c0_2 = arith.constant 0 : index
    %3 = vector.load %arg3[%c0, %c0_1, %c0_2] : memref<1x8x1xf32, #tpu.memory_space<vmem>>, vector<1x8x1xf32>
    %4 = vector.shape_cast %3 : vector<1x8x1xf32> to vector<8x1xf32>
    %c0_3 = arith.constant 0 : index
    %c0_4 = arith.constant 0 : index
    %c0_5 = arith.constant 0 : index
    %5 = vector.load %arg2[%c0_3, %c0_4, %c0_5] : memref<1x8x128xf32, #tpu.memory_space<vmem>>, vector<1x8x128xf32>
    %6 = vector.shape_cast %5 : vector<1x8x128xf32> to vector<8x128xf32>
    %cst = arith.constant dense<0.000000e+00> : vector<8xf32>
    %7 = vector.multi_reduction <add>, %6, %cst [1] : vector<8x128xf32> to vector<8xf32>
    %8 = vector.shape_cast %7 : vector<8xf32> to vector<8x1xf32>
    %9 = arith.addf %4, %8 : vector<8x1xf32>
    %c0_6 = arith.constant 0 : index
    %c0_7 = arith.constant 0 : index
    %c0_8 = arith.constant 0 : index
    %10 = vector.load %arg3[%c0_6, %c0_7, %c0_8] : memref<1x8x1xf32, #tpu.memory_space<vmem>>, vector<1x8x1xf32>
    %11 = vector.shape_cast %10 : vector<1x8x1xf32> to vector<8x1xf32>
    %12 = vector.shape_cast %9 : vector<8x1xf32> to vector<1x8x1xf32>
    tpu.vector_store %arg3[%c0_6, %c0_7, %c0_8], %12 {strides = array<i32>} : memref<1x8x1xf32, #tpu.memory_space<vmem>>, vector<1x8x1xf32>,
    return
  }
  func.func @transform_0(%arg0: i32, %arg1: i32) -> (i32, i32, i32) {
    %c0_i32 = arith.constant 0 : i32
    %c0_i32_0 = arith.constant 0 : i32
    return %arg0, %c0_i32, %arg1 : i32, i32, i32
  }
  func.func @transform_1(%arg0: i32, %arg1: i32) -> (i32, i32, i32) {
    %c0_i32 = arith.constant 0 : i32
    %c0_i32_0 = arith.constant 0 : i32
    %c0_i32_1 = arith.constant 0 : i32
    return %arg0, %c0_i32, %c0_i32_0 : i32, i32, i32
  }
}

</mosaic_0001>

<llo_original>
// kernel: tpu_custom_call.1
$region0: #{tpu_custom_call.1}
  #allocation0 [shape = 'u32[]', space=smem, size = 0x4, offset = 0x4, fixed_abs, tag = 'smem constant byte address 0x4 - core index']
  #allocation1 [shape = 'u32[144,128]{1,0:T(1,128)}', space=vmem, size = 0x12000, scoped, tag = 'internal scratch']
  %s0 = inlined_call_operand.hbm [shape: f32[2,8,128], index: 0, kind: input, shape index: {}]
  %s1 = inlined_call_operand.vmem [shape: f32[2,8,1], index: 1, kind: output, shape index: {}]
  %s2 = sld [smem:[#allocation0]]
  $region45: #{tpu_custom_call.1} parent=0
    _
  %s4 = ssub.s32 1, %s2
  %s5 = scalar_select 0, %s4, %s2
  $region1: #{tpu_custom_call.1} parent=0
    #allocation2 [shape = 'u8[8192]{0}', space=vmem, size = 0x2000, scoped, tag = 'input window, operand 0']
    #allocation3 [shape = 's32[2]{0}', space=sflag, size = 0x8, scoped, tag = 'scoped memory for tpu_custom_call.1']
    %6 = vsyncpa [#allocation3], 0
    %s7 = scalar_lea.sflag [#allocation3], 1
    %8 = vsyncpa %s7, 0
    loop: start=0, step=1, limit=4
    $region2: #{tpu_custom_call.1} parent=1 // loop_pre_header
      _
    $region3: #{tpu_custom_call.1} parent=1 // loop_header
      %s10 = sphi 0, %s14
      %p11 = scmp.ge.s32.totalorder %s10, 4
      %s17 = sphi 0, %s29
      %s18 = sphi 0, %s25
      %s19 = sphi 0, %s17
      %s20 = sphi 0, %s18
      %s21 = sphi 0, %s19
      %s22 = sphi 0, %s20
      %s34 = sphi 0, %s36
      %s37 = sphi 0, %s34
      %s38 = sphi 0, %s37
      %s54 = sphi 0, %s38
      %s60 = sphi 0, %s62
      %s63 = sphi 0, %s60
      %s64 = sphi 0, %s63
      %s80 = sphi 0, %s64
    $region4: #{tpu_custom_call.1} parent=1 // loop_header_branch
      %13 = sbr.rel (%p11) target = $region8
    $region5: #{tpu_custom_call.1} parent=1 // loop_body
      %s15 = ssub.s32 %s10, 1
      %s16 = ssub.s32 %s10, 2
      %s23 = sadd.s32 1, %s18
      %p24 = scmp.ge.s32.totalorder %s23, 1
      %s25 = scalar_select %p24, 0, %s23
      %s26 = sadd.s32 1, %s17
      %s27 = scalar_select %p24, %s26, %s17
      %p28 = scmp.ge.s32.totalorder %s27, 2
      %s29 = scalar_select %p28, 0, %s27
      %s30 = ssub.s32 %s17, %s29
      %s31 = ssub.s32 %s18, %s25
      %s32 = sor.u32 %s30, %s31
      %p33 = scmp.eq.s32.totalorder %s32, 0
      %s35 = sadd.s32 %s34, 1
      %s36 = scalar_select %p33, %s34, %s35
      %p39 = pneg %p33
      %p40 = scmp.eq.s32.totalorder %s10, 1
      %p41 = por %p39, %p40
      %p42 = scmp.ne.s32.totalorder %s34, %s37
      %p43 = scmp.eq.s32.totalorder %s10, 0
      %p44 = por %p42, %p43
      %p45 = scmp.ne.s32.totalorder %s34, %s37
      %p46 = scmp.eq.s32.totalorder %s15, 1
      %p47 = por %p45, %p46
      %p48 = scmp.ne.s32.totalorder %s37, %s38
      %p49 = scmp.eq.s32.totalorder %s15, 0
      %p50 = por %p48, %p49
      %p51 = scmp.ne.s32.totalorder %s37, %s38
      %p52 = scmp.eq.s32.totalorder %s16, 1
      %p53 = por %p51, %p52
      %p55 = scmp.ne.s32.totalorder %s38, %s54
      %p56 = scmp.eq.s32.totalorder %s16, 0
      %p57 = por %p55, %p56
      %s58 = ssub.s32 %s17, %s29
      %p59 = scmp.eq.s32.totalorder %s58, 0
      %s61 = sadd.s32 %s60, 1
      %s62 = scalar_select %p59, %s60, %s61
      %p65 = pneg %p59
      %p66 = scmp.eq.s32.totalorder %s10, 1
      %p67 = por %p65, %p66
      %p68 = scmp.ne.s32.totalorder %s60, %s63
      %p69 = scmp.eq.s32.totalorder %s10, 0
      %p70 = por %p68, %p69
      %p71 = scmp.ne.s32.totalorder %s60, %s63
      %p72 = scmp.eq.s32.totalorder %s15, 1
      %p73 = por %p71, %p72
      %p74 = scmp.ne.s32.totalorder %s63, %s64
      %p75 = scmp.eq.s32.totalorder %s15, 0
      %p76 = por %p74, %p75
      %p77 = scmp.ne.s32.totalorder %s63, %s64
      %p78 = scmp.eq.s32.totalorder %s16, 1
      %p79 = por %p77, %p78
      %p81 = scmp.ne.s32.totalorder %s64, %s80
      %p82 = scmp.eq.s32.totalorder %s16, 0
      %p83 = por %p81, %p82
      %p84 = scmp.le.s32.totalorder 1, %s10
      %p85 = scmp.lt.s32.totalorder %s10, 3
      %p86 = pnand %p84, %p85
      %p87 = pneg %p86
      // Predicated region
      $region9: #{tpu_custom_call.1} parent=5 // pred_check
        _
      $region10: #{tpu_custom_call.1} parent=5 // pred_check_branch
        %89 = sbr.rel (%p86) target = $region12
      $region11: #{tpu_custom_call.1} parent=5 // pred_region
        %s90 = ssub.s32 %s10, 1
      $region12: #{tpu_custom_call.1} parent=5 // pred_fallthru
        _
      %p91 = scmp.lt.s32.totalorder %s10, 2
      // Predicated region
      $region13: #{tpu_custom_call.1} parent=5 // pred_check
        %p92 = pneg %p91
      $region14: #{tpu_custom_call.1} parent=5 // pred_check_branch
        %94 = sbr.rel (%p92) target = $region16
      $region15: #{tpu_custom_call.1} parent=5 // pred_region
        // Predicated region
        $region17: #{tpu_custom_call.1} parent=15 // pred_check
          %p95 = pneg %p44
        $region18: #{tpu_custom_call.1} parent=15 // pred_check_branch
          %97 = sbr.rel (%p95) target = $region20
        $region19: #{tpu_custom_call.1} parent=15 // pred_region
          %s98 = sand.u32 %s34, 1
          %s99 = scalar_lea.sflag [#allocation3], %s98
          %s100 = sand.u32 %s34, 1
          %s101 = smul.addr %s100, 8
          %s102 = scalar_lea.vmem [#allocation2], %s101
          %s104 = ssub.s32 128, 128
          %105 = vsyncadd %s99, %s104
          %s106 = sadd.s32 %s18, %s17
          %s107 = smul.addr %s106, 128
          %s108 = scalar_lea.hbm %s0, %s107
          %s110 = sshll.u32 %s102, 4
          %s111 = int_to_ptr.vmem [resolvable:$true] %s110
          %113 = dma.hbm_to_vmem [thread:$0]  %s108, 128, %s111, %s99
        $region20: #{tpu_custom_call.1} parent=15 // pred_fallthru
          _
      $region16: #{tpu_custom_call.1} parent=5 // pred_fallthru
        _
      %p114 = scmp.le.s32.totalorder 1, %s10
      %p115 = scmp.lt.s32.totalorder %s10, 3
      %p116 = pnand %p114, %p115
      %p117 = pneg %p116
      // Predicated region
      $region21: #{tpu_custom_call.1} parent=5 // pred_check
        _
      $region22: #{tpu_custom_call.1} parent=5 // pred_check_branch
        %119 = sbr.rel (%p116) target = $region24
      $region23: #{tpu_custom_call.1} parent=5 // pred_region
        %s120 = ssub.s32 %s10, 1
        %s121 = sand.u32 %s37, 1
        %s122 = scalar_lea.sflag [#allocation3], %s121
        %s123 = sand.u32 %s37, 1
        %s124 = smul.addr %s123, 8
        %s125 = scalar_lea.vmem [#allocation2], %s124
        // Predicated region
        $region25: #{tpu_custom_call.1} parent=23 // pred_check
          %p126 = pneg %p50
        $region26: #{tpu_custom_call.1} parent=23 // pred_check_branch
          %128 = sbr.rel (%p126) target = $region28
        $region27: #{tpu_custom_call.1} parent=23 // pred_region
          %129 = dma.done %s122, 128
        $region28: #{tpu_custom_call.1} parent=23 // pred_fallthru
          _
        %s130 = sand.u32 %s37, 1
        %s131 = scalar_lea.sflag [#allocation3], %s130
        %s132 = sand.u32 %s37, 1
        %s133 = smul.addr %s132, 8
        %s134 = scalar_lea.vmem [#allocation2], %s133
        %p135 = pneg %p50
        %p136 = pneg %p47
        %p137 = pneg %p76
        %p138 = pneg %p73
        %p139 = scmp.lt.s32.totalorder %s19, 1
        %s140 = scalar_select %p139, %s19, 1
        %s141 = smul.addr %s140, 8
        %s142 = scalar_lea.vmem %s1, %s141
        %p143 = scmp.lt.s32.totalorder %s19, 1
        %s144 = scalar_select %p143, %s19, 1
        %s145 = smul.addr %s144, 8
        %s146 = scalar_lea.vmem %s1, %s145
        %p147 = scmp.eq.s32.totalorder %s20, 0
        // Predicated region
        $region29: #{tpu_custom_call.1} parent=23 // pred_check
          %p148 = pneg %p147
        $region30: #{tpu_custom_call.1} parent=23 // pred_check_branch
          %150 = sbr.rel (%p148) target = $region32
        $region31: #{tpu_custom_call.1} parent=23 // pred_region
          %vm151 = vcmask 7168
          %152 = vst.msk [vmem:[%s146] sm:$0xff] %vm151, 0.0
        $region32: #{tpu_custom_call.1} parent=23 // pred_fallthru
          _
        %v153 = vld [vmem:[%s146] sm:$0xff]
        %v154 = vld [vmem:[%s125] sm:$0xff]
        %155 = vadd.xlane.f32.xlu0 %v154
        %v156 = vpop.xlane.xlu0 %155
        %v157 = vadd.f32 %v153, %v156
        %vm158 = vcmask 7168
        %159 = vst.msk [vmem:[%s146] sm:$0xff] %vm158, %v157
        %p160 = scmp.lt.s32.totalorder %s19, 1
        %s161 = scalar_select %p160, %s19, 1
        %s162 = smul.addr %s161, 8
        %s163 = scalar_lea.vmem %s1, %s162
        // Predicated region
        $region33: #{tpu_custom_call.1} parent=23 // pred_check
          %p164 = pneg %p73
        $region34: #{tpu_custom_call.1} parent=23 // pred_check_branch
          %166 = sbr.rel (%p164) target = $region36
        $region35: #{tpu_custom_call.1} parent=23 // pred_region
          _
        $region36: #{tpu_custom_call.1} parent=23 // pred_fallthru
          _
      $region24: #{tpu_custom_call.1} parent=5 // pred_fallthru
        _
      %p167 = scmp.le.s32.totalorder 2, %s10
      // Predicated region
      $region37: #{tpu_custom_call.1} parent=5 // pred_check
        %p168 = pneg %p167
      $region38: #{tpu_custom_call.1} parent=5 // pred_check_branch
        %170 = sbr.rel (%p168) target = $region40
      $region39: #{tpu_custom_call.1} parent=5 // pred_region
        %s171 = ssub.s32 %s10, 2
        // Predicated region
        $region41: #{tpu_custom_call.1} parent=39 // pred_check
          %p172 = pneg %p79
        $region42: #{tpu_custom_call.1} parent=39 // pred_check_branch
          %174 = sbr.rel (%p172) target = $region44
        $region43: #{tpu_custom_call.1} parent=39 // pred_region
          %p175 = scmp.lt.s32.totalorder %s21, 1
          %s176 = scalar_select %p175, %s21, 1
          %s177 = smul.addr %s176, 8
          %s178 = scalar_lea.vmem %s1, %s177
        $region44: #{tpu_custom_call.1} parent=39 // pred_fallthru
          _
      $region40: #{tpu_custom_call.1} parent=5 // pred_fallthru
        _
    $region6: #{tpu_custom_call.1} parent=1 // loop_footer
      %s14 = sadd.s32 1, %s10
    $region7: #{tpu_custom_call.1} parent=1 // loop_footer_branch
      %9 = sbr.rel target = $region3
    $region8: #{tpu_custom_call.1} parent=1 // loop_exit
      _
    %179 = vsyncpa [#allocation3], 1
    %s180 = scalar_lea.sflag [#allocation3], 1
    %181 = vsyncpa %s180, 1

</llo_original>
